<compile_context>
chip_gen: v5e
topology: v5e:2x2
jax: 0.10.0
libtpu: 0.0.40
codegen_flags: <defaults>
</compile_context>

<pallas_src>
import functools
import numpy as np
import jax
import jax.numpy as jnp
from jax import lax
from jax.experimental import pallas as pl
from jax.experimental.pallas import tpu as pltpu


# ----------------------------------------------------------------------------
# Fused conv-as-matmul + GroupNorm kernel (one batch element per grid step)
# ----------------------------------------------------------------------------
def _conv_gn_kernel(p_ref, w_ref, b_ref, gamma_ref, beta_ref, o_ref, *,
                    n_groups, eps, inv_cnt):
    # p_ref     : (1, K, HW)   bf16  im2col patches (lane-dense, built in wrapper)
    # w_ref     : (Co, K)      bf16  conv weight, im2col ordered
    # b_ref     : (Co, 1)      f32   conv bias
    # gamma_ref : (Co, 1)      f32   GroupNorm weight
    # beta_ref  : (Co, 1)      f32   GroupNorm bias
    # o_ref     : (1, Co, HW)  lane-dense output slab
    patches = p_ref[0]                                        # (K, HW) bf16

    # ---- convolution: one bf16 MXU matmul, f32 accumulation, + bias ----
    y = jnp.dot(w_ref[...], patches,
                preferred_element_type=jnp.float32)           # (Co, HW) f32
    y = y + b_ref[...]                                        # lane-broadcast bias

    Co = y.shape[0]
    cpg = Co // n_groups
    gamma = gamma_ref[...]
    beta = beta_ref[...]

    # ---- GroupNorm: two-pass per-group stats on static sublane slices ----
    outs = []
    for g in range(n_groups):                                 # static unroll (tiny)
        r0 = g * cpg
        yg = y[r0:r0 + cpg, :]                                # (cpg, HW)
        s = jnp.sum(yg, axis=1, keepdims=True)                # (cpg, 1) lane reduce
        mean = jnp.sum(s, axis=0, keepdims=True) * inv_cnt    # (1, 1)
        yc = yg - mean
        sq = jnp.sum(yc * yc, axis=1, keepdims=True)          # (cpg, 1)
        var = jnp.sum(sq, axis=0, keepdims=True) * inv_cnt    # (1, 1) biased var
        scale = gamma[r0:r0 + cpg, :] * lax.rsqrt(var + eps)  # (cpg, 1)
        outs.append(yc * scale + beta[r0:r0 + cpg, :])
    # single lane-dense slab store (HW is a multiple of 128 at these shapes)
    o_ref[0] = jnp.concatenate(outs, axis=0).astype(o_ref.dtype)


# ----------------------------------------------------------------------------
# Wrapper: layout plumbing (pad + im2col + weight reorder) + pallas_call
# ----------------------------------------------------------------------------
def conv2d_groupnorm(x, weight, bias, gamma, beta, *,
                     stride=1, padding=1, dilation=1, n_groups=16, eps=1e-5):
    """Forward of conv2DGroupNorm. x: (N,C,H,W), weight: (Co,C,kh,kw)."""
    N, C, H, W = x.shape
    Co, Cw, kh, kw = weight.shape
    assert Cw == C and Co % n_groups == 0

    out_h = (H + 2 * padding - dilation * (kh - 1) - 1) // stride + 1
    out_w = (W + 2 * padding - dilation * (kw - 1) - 1) // stride + 1
    HW = out_h * out_w
    K = kh * kw * C

    # zero-pad and build the im2col patch matrix in the wrapper (pure XLA layout
    # plumbing; keeps the kernel free of relayouts and strided accesses).
    xp = jnp.pad(x, ((0, 0), (0, 0), (padding, padding), (padding, padding)))
    cols = []
    for i in range(kh):
        for j in range(kw):
            di = i * dilation
            dj = j * dilation
            cols.append(xp[:, :, di:di + (out_h - 1) * stride + 1:stride,
                                 dj:dj + (out_w - 1) * stride + 1:stride])
    # (N, kh*kw, C, Ho, Wo) -> (N, K, HW); lane-dense MXU RHS, cast to bf16
    patches = jnp.stack(cols, axis=1).reshape(N, K, HW).astype(jnp.bfloat16)

    # im2col-ordered weight: w_mat[o, (i*kw + j)*C + c] = weight[o, c, i, j]
    w_mat = jnp.transpose(weight, (0, 2, 3, 1)).reshape(Co, K).astype(jnp.bfloat16)
    b_col = bias.reshape(Co, 1).astype(jnp.float32)
    g_col = gamma.reshape(Co, 1).astype(jnp.float32)
    be_col = beta.reshape(Co, 1).astype(jnp.float32)

    kernel = functools.partial(
        _conv_gn_kernel, n_groups=n_groups, eps=eps,
        inv_cnt=1.0 / float((Co // n_groups) * HW))

    out_flat = pl.pallas_call(
        kernel,
        out_shape=jax.ShapeDtypeStruct((N, Co, HW), x.dtype),
        grid=(N,),
        in_specs=[
            pl.BlockSpec((1, K, HW), lambda n: (n, 0, 0)),   # patches (lane-dense)
            pl.BlockSpec((Co, K), lambda n: (0, 0)),         # conv weight (resident)
            pl.BlockSpec((Co, 1), lambda n: (0, 0)),         # conv bias
            pl.BlockSpec((Co, 1), lambda n: (0, 0)),         # GN gamma
            pl.BlockSpec((Co, 1), lambda n: (0, 0)),         # GN beta
        ],
        out_specs=pl.BlockSpec((1, Co, HW), lambda n: (n, 0, 0)),  # lane-dense slab
        compiler_params=pltpu.CompilerParams(
            dimension_semantics=("parallel",)),               # keeps v7x's 2 TCs busy
    )(patches, w_mat, b_col, g_col, be_col)

    return out_flat.reshape(N, Co, out_h, out_w)


# ----------------------------------------------------------------------------
# Pure-JAX reference (single post-run correctness check)
# ----------------------------------------------------------------------------
def _reference(x, weight, bias, gamma, beta, *, stride, padding, dilation,
               n_groups, eps, conv_dtype=jnp.float32):
    conv = lax.conv_general_dilated(
        x.astype(conv_dtype), weight.astype(conv_dtype),
        window_strides=(stride, stride),
        padding=((padding, padding), (padding, padding)),
        rhs_dilation=(dilation, dilation),
        dimension_numbers=("NCHW", "OIHW", "NCHW"),
        preferred_element_type=jnp.float32)
    conv = conv + bias[None, :, None, None]
    N, Co, Ho, Wo = conv.shape
    g = conv.reshape(N, n_groups, -1)
    mean = g.mean(axis=2, keepdims=True)
    var = g.var(axis=2, keepdims=True)                        # biased (PyTorch GN)
    norm = ((g - mean) * lax.rsqrt(var + eps)).reshape(N, Co, Ho, Wo)
    return norm * gamma[None, :, None, None] + beta[None, :, None, None]


if __name__ == "__main__":
    key = jax.random.PRNGKey(0)
    kx, kw_, kb = jax.random.split(key, 3)

    # Small deterministic instantiation of conv2DGroupNorm:
    #   in_channels=4, n_filters=16, k_size=3, stride=1, padding=1,
    #   dilation=1, bias=True, n_groups=4
    N, C, H, W = 2, 4, 16, 16
    Co, kh, kw = 16, 3, 3
    stride, padding, dilation, n_groups, eps = 1, 1, 1, 4, 1e-5

    x = jax.random.normal(kx, (N, C, H, W), jnp.float32)
    weight = jax.random.normal(kw_, (Co, C, kh, kw), jnp.float32) * 0.1
    bias = jax.random.normal(kb, (Co,), jnp.float32) * 0.05
    gamma = 1.0 + 0.01 * jnp.arange(Co, dtype=jnp.float32)
    beta = jnp.full((Co,), 0.05, jnp.float32)

    fwd = jax.jit(functools.partial(
        conv2d_groupnorm, stride=stride, padding=padding, dilation=dilation,
        n_groups=n_groups, eps=eps))

    out = jax.block_until_ready(fwd(x, weight, bias, gamma, beta))
    assert out.shape == (N, Co, H, W), out.shape

    # Tight check vs a reference whose conv uses the same bf16 operands
    # (isolates kernel correctness from intentional bf16 MXU rounding).
    ref_bf16 = _reference(x, weight, bias, gamma, beta, stride=stride,
                          padding=padding, dilation=dilation,
                          n_groups=n_groups, eps=eps, conv_dtype=jnp.bfloat16)
    err = float(jnp.max(jnp.abs(out - ref_bf16)))
    assert err < 5e-3, f"kernel vs bf16-operand reference mismatch: {err}"

    # Loose check vs the full-f32 reference (bounds the bf16 operand rounding).
    ref_f32 = _reference(x, weight, bias, gamma, beta, stride=stride,
                         padding=padding, dilation=dilation,
                         n_groups=n_groups, eps=eps, conv_dtype=jnp.float32)
    err32 = float(jnp.max(jnp.abs(out - ref_f32)))
    assert err32 < 5e-2, f"kernel vs f32 reference mismatch: {err32}"

    print("KERNEL_OK")
</pallas_src>

<mosaic_0001>
module attributes {stable_mosaic.version = 11 : i64} {
  func.func @_conv_gn_kernel(%arg0: i32, %arg1: memref<1x36x256xbf16, #tpu.memory_space<vmem>>, %arg2: memref<16x36xbf16, #tpu.memory_space<vmem>>, %arg3: memref<16x1xf32, #tpu.memory_space<vmem>>, %arg4: memref<16x1xf32, #tpu.memory_space<vmem>>, %arg5: memref<16x1xf32, #tpu.memory_space<vmem>>, %arg6: memref<1x16x256xf32, #tpu.memory_space<vmem>>) attributes {dimension_semantics = [#tpu.dimension_semantics<parallel>], iteration_bounds = array<i64: 2>, scalar_prefetch = 0 : i64, scratch_operands = 0 : i64, tpu.core_type = #tpu.core_type<tc>, window_params = [{transform_indices = @transform_0, window_bounds = array<i64: 1, 36, 256>}, {pipeline_mode = #tpu.pipeline_mode<synchronous>, transform_indices = @transform_1, window_bounds = array<i64: 16, 36>}, {pipeline_mode = #tpu.pipeline_mode<synchronous>, transform_indices = @transform_2, window_bounds = array<i64: 16, 1>}, {pipeline_mode = #tpu.pipeline_mode<synchronous>, transform_indices = @transform_3, window_bounds = array<i64: 16, 1>}, {pipeline_mode = #tpu.pipeline_mode<synchronous>, transform_indices = @transform_4, window_bounds = array<i64: 16, 1>}, {transform_indices = @transform_5, window_bounds = array<i64: 1, 16, 256>}]} {
    %c0 = arith.constant 0 : index
    %c0_0 = arith.constant 0 : index
    %c0_1 = arith.constant 0 : index
    %0 = vector.load %arg1[%c0, %c0_0, %c0_1] : memref<1x36x256xbf16, #tpu.memory_space<vmem>>, vector<1x36x256xbf16>
    %1 = vector.shape_cast %0 : vector<1x36x256xbf16> to vector<36x256xbf16>
    %c0_2 = arith.constant 0 : index
    %c0_3 = arith.constant 0 : index
    %2 = vector.load %arg2[%c0_2, %c0_3] : memref<16x36xbf16, #tpu.memory_space<vmem>>, vector<16x36xbf16>
    %cst = arith.constant dense<0.000000e+00> : vector<16x256xf32>
    %3 = tpu.matmul %2, %1, %cst {dimension_numbers = #tpu.dot_dimension_numbers<[1], [0], [0], [1], [0, 0, 1, 1], [], []>} : vector<16x36xbf16>, vector<36x256xbf16>, vector<16x256xf32> -> vector<16x256xf32>
    %c0_4 = arith.constant 0 : index
    %c0_5 = arith.constant 0 : index
    %4 = vector.load %arg3[%c0_4, %c0_5] : memref<16x1xf32, #tpu.memory_space<vmem>>, vector<16x1xf32>
    %5 = vector.broadcast %4 : vector<16x1xf32> to vector<16x256xf32>
    %6 = arith.addf %3, %5 : vector<16x256xf32>
    %c0_6 = arith.constant 0 : index
    %c0_7 = arith.constant 0 : index
    %7 = vector.load %arg4[%c0_6, %c0_7] : memref<16x1xf32, #tpu.memory_space<vmem>>, vector<16x1xf32>
    %c0_8 = arith.constant 0 : index
    %c0_9 = arith.constant 0 : index
    %8 = vector.load %arg5[%c0_8, %c0_9] : memref<16x1xf32, #tpu.memory_space<vmem>>, vector<16x1xf32>
    %9 = vector.extract_strided_slice %6 {offsets = [0, 0], sizes = [4, 256], strides = [1, 1]} : vector<16x256xf32> to vector<4x256xf32>
    %cst_10 = arith.constant dense<0.000000e+00> : vector<4xf32>
    %10 = vector.multi_reduction <add>, %9, %cst_10 [1] : vector<4x256xf32> to vector<4xf32>
    %11 = vector.shape_cast %10 : vector<4xf32> to vector<4x1xf32>
    %cst_11 = arith.constant dense<0.000000e+00> : vector<1xf32>
    %12 = vector.multi_reduction <add>, %11, %cst_11 [0] : vector<4x1xf32> to vector<1xf32>
    %13 = vector.shape_cast %12 : vector<1xf32> to vector<1x1xf32>
    %cst_12 = arith.constant 9.765625E-4 : f32
    %14 = vector.broadcast %cst_12 : f32 to vector<1x1xf32>
    %15 = arith.mulf %13, %14 : vector<1x1xf32>
    %16 = vector.broadcast %15 : vector<1x1xf32> to vector<4x256xf32>
    %17 = arith.subf %9, %16 : vector<4x256xf32>
    %18 = arith.mulf %17, %17 : vector<4x256xf32>
    %cst_13 = arith.constant dense<0.000000e+00> : vector<4xf32>
    %19 = vector.multi_reduction <add>, %18, %cst_13 [1] : vector<4x256xf32> to vector<4xf32>
    %20 = vector.shape_cast %19 : vector<4xf32> to vector<4x1xf32>
    %cst_14 = arith.constant dense<0.000000e+00> : vector<1xf32>
    %21 = vector.multi_reduction <add>, %20, %cst_14 [0] : vector<4x1xf32> to vector<1xf32>
    %22 = vector.shape_cast %21 : vector<1xf32> to vector<1x1xf32>
    %cst_15 = arith.constant 9.765625E-4 : f32
    %23 = vector.broadcast %cst_15 : f32 to vector<1x1xf32>
    %24 = arith.mulf %22, %23 : vector<1x1xf32>
    %25 = vector.extract_strided_slice %7 {offsets = [0, 0], sizes = [4, 1], strides = [1, 1]} : vector<16x1xf32> to vector<4x1xf32>
    %cst_16 = arith.constant 9.99999974E-6 : f32
    %26 = vector.broadcast %cst_16 : f32 to vector<1x1xf32>
    %27 = arith.addf %24, %26 : vector<1x1xf32>
    %28 = math.rsqrt %27 : vector<1x1xf32>
    %29 = vector.broadcast %28 : vector<1x1xf32> to vector<4x1xf32>
    %30 = arith.mulf %25, %29 : vector<4x1xf32>
    %31 = vector.broadcast %30 : vector<4x1xf32> to vector<4x256xf32>
    %32 = arith.mulf %17, %31 : vector<4x256xf32>
    %33 = vector.extract_strided_slice %8 {offsets = [0, 0], sizes = [4, 1], strides = [1, 1]} : vector<16x1xf32> to vector<4x1xf32>
    %34 = vector.broadcast %33 : vector<4x1xf32> to vector<4x256xf32>
    %35 = arith.addf %32, %34 : vector<4x256xf32>
    %36 = vector.extract_strided_slice %6 {offsets = [4, 0], sizes = [4, 256], strides = [1, 1]} : vector<16x256xf32> to vector<4x256xf32>
    %cst_17 = arith.constant dense<0.000000e+00> : vector<4xf32>
    %37 = vector.multi_reduction <add>, %36, %cst_17 [1] : vector<4x256xf32> to vector<4xf32>
    %38 = vector.shape_cast %37 : vector<4xf32> to vector<4x1xf32>
    %cst_18 = arith.constant dense<0.000000e+00> : vector<1xf32>
    %39 = vector.multi_reduction <add>, %38, %cst_18 [0] : vector<4x1xf32> to vector<1xf32>
    %40 = vector.shape_cast %39 : vector<1xf32> to vector<1x1xf32>
    %cst_19 = arith.constant 9.765625E-4 : f32
    %41 = vector.broadcast %cst_19 : f32 to vector<1x1xf32>
    %42 = arith.mulf %40, %41 : vector<1x1xf32>
    %43 = vector.broadcast %42 : vector<1x1xf32> to vector<4x256xf32>
    %44 = arith.subf %36, %43 : vector<4x256xf32>
    %45 = arith.mulf %44, %44 : vector<4x256xf32>
    %cst_20 = arith.constant dense<0.000000e+00> : vector<4xf32>
    %46 = vector.multi_reduction <add>, %45, %cst_20 [1] : vector<4x256xf32> to vector<4xf32>
    %47 = vector.shape_cast %46 : vector<4xf32> to vector<4x1xf32>
    %cst_21 = arith.constant dense<0.000000e+00> : vector<1xf32>
    %48 = vector.multi_reduction <add>, %47, %cst_21 [0] : vector<4x1xf32> to vector<1xf32>
    %49 = vector.shape_cast %48 : vector<1xf32> to vector<1x1xf32>
    %cst_22 = arith.constant 9.765625E-4 : f32
    %50 = vector.broadcast %cst_22 : f32 to vector<1x1xf32>
    %51 = arith.mulf %49, %50 : vector<1x1xf32>
    %52 = vector.extract_strided_slice %7 {offsets = [4, 0], sizes = [4, 1], strides = [1, 1]} : vector<16x1xf32> to vector<4x1xf32>
    %cst_23 = arith.constant 9.99999974E-6 : f32
    %53 = vector.broadcast %cst_23 : f32 to vector<1x1xf32>
    %54 = arith.addf %51, %53 : vector<1x1xf32>
    %55 = math.rsqrt %54 : vector<1x1xf32>
    %56 = vector.broadcast %55 : vector<1x1xf32> to vector<4x1xf32>
    %57 = arith.mulf %52, %56 : vector<4x1xf32>
    %58 = vector.broadcast %57 : vector<4x1xf32> to vector<4x256xf32>
    %59 = arith.mulf %44, %58 : vector<4x256xf32>
    %60 = vector.extract_strided_slice %8 {offsets = [4, 0], sizes = [4, 1], strides = [1, 1]} : vector<16x1xf32> to vector<4x1xf32>
    %61 = vector.broadcast %60 : vector<4x1xf32> to vector<4x256xf32>
    %62 = arith.addf %59, %61 : vector<4x256xf32>
    %63 = vector.extract_strided_slice %6 {offsets = [8, 0], sizes = [4, 256], strides = [1, 1]} : vector<16x256xf32> to vector<4x256xf32>
    %cst_24 = arith.constant dense<0.000000e+00> : vector<4xf32>
    %64 = vector.multi_reduction <add>, %63, %cst_24 [1] : vector<4x256xf32> to vector<4xf32>
    %65 = vector.shape_cast %64 : vector<4xf32> to vector<4x1xf32>
    %cst_25 = arith.constant dense<0.000000e+00> : vector<1xf32>
    %66 = vector.multi_reduction <add>, %65, %cst_25 [0] : vector<4x1xf32> to vector<1xf32>
    %67 = vector.shape_cast %66 : vector<1xf32> to vector<1x1xf32>
    %cst_26 = arith.constant 9.765625E-4 : f32
    %68 = vector.broadcast %cst_26 : f32 to vector<1x1xf32>
    %69 = arith.mulf %67, %68 : vector<1x1xf32>
    %70 = vector.broadcast %69 : vector<1x1xf32> to vector<4x256xf32>
    %71 = arith.subf %63, %70 : vector<4x256xf32>
    %72 = arith.mulf %71, %71 : vector<4x256xf32>
    %cst_27 = arith.constant dense<0.000000e+00> : vector<4xf32>
    %73 = vector.multi_reduction <add>, %72, %cst_27 [1] : vector<4x256xf32> to vector<4xf32>
    %74 = vector.shape_cast %73 : vector<4xf32> to vector<4x1xf32>
    %cst_28 = arith.constant dense<0.000000e+00> : vector<1xf32>
    %75 = vector.multi_reduction <add>, %74, %cst_28 [0] : vector<4x1xf32> to vector<1xf32>
    %76 = vector.shape_cast %75 : vector<1xf32> to vector<1x1xf32>
    %cst_29 = arith.constant 9.765625E-4 : f32
    %77 = vector.broadcast %cst_29 : f32 to vector<1x1xf32>
    %78 = arith.mulf %76, %77 : vector<1x1xf32>
    %79 = vector.extract_strided_slice %7 {offsets = [8, 0], sizes = [4, 1], strides = [1, 1]} : vector<16x1xf32> to vector<4x1xf32>
    %cst_30 = arith.constant 9.99999974E-6 : f32
    %80 = vector.broadcast %cst_30 : f32 to vector<1x1xf32>
    %81 = arith.addf %78, %80 : vector<1x1xf32>
    %82 = math.rsqrt %81 : vector<1x1xf32>
    %83 = vector.broadcast %82 : vector<1x1xf32> to vector<4x1xf32>
    %84 = arith.mulf %79, %83 : vector<4x1xf32>
    %85 = vector.broadcast %84 : vector<4x1xf32> to vector<4x256xf32>
    %86 = arith.mulf %71, %85 : vector<4x256xf32>
    %87 = vector.extract_strided_slice %8 {offsets = [8, 0], sizes = [4, 1], strides = [1, 1]} : vector<16x1xf32> to vector<4x1xf32>
    %88 = vector.broadcast %87 : vector<4x1xf32> to vector<4x256xf32>
    %89 = arith.addf %86, %88 : vector<4x256xf32>
    %90 = vector.extract_strided_slice %6 {offsets = [12, 0], sizes = [4, 256], strides = [1, 1]} : vector<16x256xf32> to vector<4x256xf32>
    %cst_31 = arith.constant dense<0.000000e+00> : vector<4xf32>
    %91 = vector.multi_reduction <add>, %90, %cst_31 [1] : vector<4x256xf32> to vector<4xf32>
    %92 = vector.shape_cast %91 : vector<4xf32> to vector<4x1xf32>
    %cst_32 = arith.constant dense<0.000000e+00> : vector<1xf32>
    %93 = vector.multi_reduction <add>, %92, %cst_32 [0] : vector<4x1xf32> to vector<1xf32>
    %94 = vector.shape_cast %93 : vector<1xf32> to vector<1x1xf32>
    %cst_33 = arith.constant 9.765625E-4 : f32
    %95 = vector.broadcast %cst_33 : f32 to vector<1x1xf32>
    %96 = arith.mulf %94, %95 : vector<1x1xf32>
    %97 = vector.broadcast %96 : vector<1x1xf32> to vector<4x256xf32>
    %98 = arith.subf %90, %97 : vector<4x256xf32>
    %99 = arith.mulf %98, %98 : vector<4x256xf32>
    %cst_34 = arith.constant dense<0.000000e+00> : vector<4xf32>
    %100 = vector.multi_reduction <add>, %99, %cst_34 [1] : vector<4x256xf32> to vector<4xf32>
    %101 = vector.shape_cast %100 : vector<4xf32> to vector<4x1xf32>
    %cst_35 = arith.constant dense<0.000000e+00> : vector<1xf32>
    %102 = vector.multi_reduction <add>, %101, %cst_35 [0] : vector<4x1xf32> to vector<1xf32>
    %103 = vector.shape_cast %102 : vector<1xf32> to vector<1x1xf32>
    %cst_36 = arith.constant 9.765625E-4 : f32
    %104 = vector.broadcast %cst_36 : f32 to vector<1x1xf32>
    %105 = arith.mulf %103, %104 : vector<1x1xf32>
    %106 = vector.extract_strided_slice %7 {offsets = [12, 0], sizes = [4, 1], strides = [1, 1]} : vector<16x1xf32> to vector<4x1xf32>
    %cst_37 = arith.constant 9.99999974E-6 : f32
    %107 = vector.broadcast %cst_37 : f32 to vector<1x1xf32>
    %108 = arith.addf %105, %107 : vector<1x1xf32>
    %109 = math.rsqrt %108 : vector<1x1xf32>
    %110 = vector.broadcast %109 : vector<1x1xf32> to vector<4x1xf32>
    %111 = arith.mulf %106, %110 : vector<4x1xf32>
    %112 = vector.broadcast %111 : vector<4x1xf32> to vector<4x256xf32>
    %113 = arith.mulf %98, %112 : vector<4x256xf32>
    %114 = vector.extract_strided_slice %8 {offsets = [12, 0], sizes = [4, 1], strides = [1, 1]} : vector<16x1xf32> to vector<4x1xf32>
    %115 = vector.broadcast %114 : vector<4x1xf32> to vector<4x256xf32>
    %116 = arith.addf %113, %115 : vector<4x256xf32>
    %117 = tpu.concatenate %35, %62, %89, %116 in 0 : vector<4x256xf32>, vector<4x256xf32>, vector<4x256xf32>, vector<4x256xf32> -> vector<16x256xf32>
    %c0_38 = arith.constant 0 : index
    %c0_39 = arith.constant 0 : index
    %c0_40 = arith.constant 0 : index
    %118 = vector.load %arg6[%c0_38, %c0_39, %c0_40] : memref<1x16x256xf32, #tpu.memory_space<vmem>>, vector<1x16x256xf32>
    %119 = vector.shape_cast %118 : vector<1x16x256xf32> to vector<16x256xf32>
    %120 = vector.shape_cast %117 : vector<16x256xf32> to vector<1x16x256xf32>
    tpu.vector_store %arg6[%c0_38, %c0_39, %c0_40], %120 {strides = array<i32>} : memref<1x16x256xf32, #tpu.memory_space<vmem>>, vector<1x16x256xf32>,
    return
  }
  func.func @transform_0(%arg0: i32) -> (i32, i32, i32) {
    %c0_i32 = arith.constant 0 : i32
    %c0_i32_0 = arith.constant 0 : i32
    %c0_i32_1 = arith.constant 0 : i32
    return %arg0, %c0_i32, %c0_i32_0 : i32, i32, i32
  }
  func.func @transform_1(%arg0: i32) -> (i32, i32) {
    %c0_i32 = arith.constant 0 : i32
    %c0_i32_0 = arith.constant 0 : i32
    %c0_i32_1 = arith.constant 0 : i32
    return %c0_i32, %c0_i32_0 : i32, i32
  }
  func.func @transform_2(%arg0: i32) -> (i32, i32) {
    %c0_i32 = arith.constant 0 : i32
    %c0_i32_0 = arith.constant 0 : i32
    %c0_i32_1 = arith.constant 0 : i32
    return %c0_i32, %c0_i32_0 : i32, i32
  }
  func.func @transform_3(%arg0: i32) -> (i32, i32) {
    %c0_i32 = arith.constant 0 : i32
    %c0_i32_0 = arith.constant 0 : i32
    %c0_i32_1 = arith.constant 0 : i32
    return %c0_i32, %c0_i32_0 : i32, i32
  }
  func.func @transform_4(%arg0: i32) -> (i32, i32) {
    %c0_i32 = arith.constant 0 : i32
    %c0_i32_0 = arith.constant 0 : i32
    %c0_i32_1 = arith.constant 0 : i32
    return %c0_i32, %c0_i32_0 : i32, i32
  }
  func.func @transform_5(%arg0: i32) -> (i32, i32, i32) {
    %c0_i32 = arith.constant 0 : i32
    %c0_i32_0 = arith.constant 0 : i32
    %c0_i32_1 = arith.constant 0 : i32
    return %arg0, %c0_i32, %c0_i32_0 : i32, i32, i32
  }
}

</mosaic_0001>

<llo_original>
// kernel: conv2d_groupnorm.1
$region0: #{conv2d_groupnorm.1}
  #allocation0 [shape = 'u32[]', space=smem, size = 0x4, offset = 0x4, fixed_abs, tag = 'smem constant byte address 0x4 - core index']
  #allocation1 [shape = 'u32[72,128]{1,0:T(1,128)}', space=vmem, size = 0x9000, scoped, tag = 'internal scratch']
  %s0 = inlined_call_operand.vmem [shape: bf16[2,36,256], index: 0, kind: input, shape index: {}]
  %s1 = inlined_call_operand.vmem [shape: bf16[16,36], index: 1, kind: input, shape index: {}]
  %s2 = inlined_call_operand.vmem [shape: f32[16,1], index: 2, kind: input, shape index: {}]
  %s3 = inlined_call_operand.vmem [shape: f32[16,1], index: 3, kind: input, shape index: {}]
  %s4 = inlined_call_operand.vmem [shape: f32[16,1], index: 4, kind: input, shape index: {}]
  %s5 = inlined_call_operand.vmem [shape: f32[2,16,256], index: 5, kind: output, shape index: {}]
  %s6 = sld [smem:[#allocation0]]
  $region53: #{conv2d_groupnorm.1} parent=0
    _
  %s8 = ssub.s32 1, %s6
  %s9 = scalar_select 0, %s8, %s6
  loop: start=0, step=1, limit=4
  $region2: #{conv2d_groupnorm.1} parent=0 // loop_pre_header
    _
  $region3: #{conv2d_groupnorm.1} parent=0 // loop_header
    %s11 = sphi 0, %s15
    %p12 = scmp.ge.s32.totalorder %s11, 4
    %s21 = sphi 0, %s23
    %s24 = sphi 0, %s21
    %s25 = sphi 0, %s24
    %s41 = sphi 0, %s25
    %s45 = sphi 0, %s45
    %s47 = sphi 0, %s45
    %s48 = sphi 0, %s47
    %s62 = sphi 0, %s48
    %s66 = sphi 0, %s66
    %s68 = sphi 0, %s66
    %s69 = sphi 0, %s68
    %s83 = sphi 0, %s69
    %s87 = sphi 0, %s87
    %s89 = sphi 0, %s87
    %s90 = sphi 0, %s89
    %s104 = sphi 0, %s90
    %s108 = sphi 0, %s108
    %s110 = sphi 0, %s108
    %s111 = sphi 0, %s110
    %s125 = sphi 0, %s111
    %s131 = sphi 0, %s133
    %s134 = sphi 0, %s131
    %s135 = sphi 0, %s134
    %s151 = sphi 0, %s135
  $region4: #{conv2d_groupnorm.1} parent=0 // loop_header_branch
    %14 = sbr.rel (%p12) target = $region8
  $region5: #{conv2d_groupnorm.1} parent=0 // loop_body
    %s16 = ssub.s32 %s11, 1
    %s17 = ssub.s32 %s11, 2
    %s18 = sadd.s32 %s11, 1
    %s19 = ssub.s32 %s11, %s18
    %p20 = scmp.eq.s32.totalorder %s19, 0
    %s22 = sadd.s32 %s21, 1
    %s23 = scalar_select %p20, %s21, %s22
    %p26 = pneg %p20
    %p27 = scmp.eq.s32.totalorder %s11, 1
    %p28 = por %p26, %p27
    %p29 = scmp.ne.s32.totalorder %s21, %s24
    %p30 = scmp.eq.s32.totalorder %s11, 0
    %p31 = por %p29, %p30
    %p32 = scmp.ne.s32.totalorder %s21, %s24
    %p33 = scmp.eq.s32.totalorder %s16, 1
    %p34 = por %p32, %p33
    %p35 = scmp.ne.s32.totalorder %s24, %s25
    %p36 = scmp.eq.s32.totalorder %s16, 0
    %p37 = por %p35, %p36
    %p38 = scmp.ne.s32.totalorder %s24, %s25
    %p39 = scmp.eq.s32.totalorder %s17, 1
    %p40 = por %p38, %p39
    %p42 = scmp.ne.s32.totalorder %s25, %s41
    %p43 = scmp.eq.s32.totalorder %s17, 0
    %p44 = por %p42, %p43
    %s46 = sadd.s32 %s45, 1
    %p49 = scmp.eq.s32.totalorder %s11, 1
    %p50 = scmp.ne.s32.totalorder %s45, %s47
    %p51 = scmp.eq.s32.totalorder %s11, 0
    %p52 = por %p50, %p51
    %p53 = scmp.ne.s32.totalorder %s45, %s47
    %p54 = scmp.eq.s32.totalorder %s16, 1
    %p55 = por %p53, %p54
    %p56 = scmp.ne.s32.totalorder %s47, %s48
    %p57 = scmp.eq.s32.totalorder %s16, 0
    %p58 = por %p56, %p57
    %p59 = scmp.ne.s32.totalorder %s47, %s48
    %p60 = scmp.eq.s32.totalorder %s17, 1
    %p61 = por %p59, %p60
    %p63 = scmp.ne.s32.totalorder %s48, %s62
    %p64 = scmp.eq.s32.totalorder %s17, 0
    %p65 = por %p63, %p64
    %s67 = sadd.s32 %s66, 1
    %p70 = scmp.eq.s32.totalorder %s11, 1
    %p71 = scmp.ne.s32.totalorder %s66, %s68
    %p72 = scmp.eq.s32.totalorder %s11, 0
    %p73 = por %p71, %p72
    %p74 = scmp.ne.s32.totalorder %s66, %s68
    %p75 = scmp.eq.s32.totalorder %s16, 1
    %p76 = por %p74, %p75
    %p77 = scmp.ne.s32.totalorder %s68, %s69
    %p78 = scmp.eq.s32.totalorder %s16, 0
    %p79 = por %p77, %p78
    %p80 = scmp.ne.s32.totalorder %s68, %s69
    %p81 = scmp.eq.s32.totalorder %s17, 1
    %p82 = por %p80, %p81
    %p84 = scmp.ne.s32.totalorder %s69, %s83
    %p85 = scmp.eq.s32.totalorder %s17, 0
    %p86 = por %p84, %p85
    %s88 = sadd.s32 %s87, 1
    %p91 = scmp.eq.s32.totalorder %s11, 1
    %p92 = scmp.ne.s32.totalorder %s87, %s89
    %p93 = scmp.eq.s32.totalorder %s11, 0
    %p94 = por %p92, %p93
    %p95 = scmp.ne.s32.totalorder %s87, %s89
    %p96 = scmp.eq.s32.totalorder %s16, 1
    %p97 = por %p95, %p96
    %p98 = scmp.ne.s32.totalorder %s89, %s90
    %p99 = scmp.eq.s32.totalorder %s16, 0
    %p100 = por %p98, %p99
    %p101 = scmp.ne.s32.totalorder %s89, %s90
    %p102 = scmp.eq.s32.totalorder %s17, 1
    %p103 = por %p101, %p102
    %p105 = scmp.ne.s32.totalorder %s90, %s104
    %p106 = scmp.eq.s32.totalorder %s17, 0
    %p107 = por %p105, %p106
    %s109 = sadd.s32 %s108, 1
    %p112 = scmp.eq.s32.totalorder %s11, 1
    %p113 = scmp.ne.s32.totalorder %s108, %s110
    %p114 = scmp.eq.s32.totalorder %s11, 0
    %p115 = por %p113, %p114
    %p116 = scmp.ne.s32.totalorder %s108, %s110
    %p117 = scmp.eq.s32.totalorder %s16, 1
    %p118 = por %p116, %p117
    %p119 = scmp.ne.s32.totalorder %s110, %s111
    %p120 = scmp.eq.s32.totalorder %s16, 0
    %p121 = por %p119, %p120
    %p122 = scmp.ne.s32.totalorder %s110, %s111
    %p123 = scmp.eq.s32.totalorder %s17, 1
    %p124 = por %p122, %p123
    %p126 = scmp.ne.s32.totalorder %s111, %s125
    %p127 = scmp.eq.s32.totalorder %s17, 0
    %p128 = por %p126, %p127
    %s129 = ssub.s32 %s11, %s18
    %p130 = scmp.eq.s32.totalorder %s129, 0
    %s132 = sadd.s32 %s131, 1
    %s133 = scalar_select %p130, %s131, %s132
    %p136 = pneg %p130
    %p137 = scmp.eq.s32.totalorder %s11, 1
    %p138 = por %p136, %p137
    %p139 = scmp.ne.s32.totalorder %s131, %s134
    %p140 = scmp.eq.s32.totalorder %s11, 0
    %p141 = por %p139, %p140
    %p142 = scmp.ne.s32.totalorder %s131, %s134
    %p143 = scmp.eq.s32.totalorder %s16, 1
    %p144 = por %p142, %p143
    %p145 = scmp.ne.s32.totalorder %s134, %s135
    %p146 = scmp.eq.s32.totalorder %s16, 0
    %p147 = por %p145, %p146
    %p148 = scmp.ne.s32.totalorder %s134, %s135
    %p149 = scmp.eq.s32.totalorder %s17, 1
    %p150 = por %p148, %p149
    %p152 = scmp.ne.s32.totalorder %s135, %s151
    %p153 = scmp.eq.s32.totalorder %s17, 0
    %p154 = por %p152, %p153
    %p155 = scmp.le.s32.totalorder 1, %s11
    %p156 = scmp.lt.s32.totalorder %s11, 3
    %p157 = pnand %p155, %p156
    %p158 = pneg %p157
    // Predicated region
    $region9: #{conv2d_groupnorm.1} parent=5 // pred_check
      _
    $region10: #{conv2d_groupnorm.1} parent=5 // pred_check_branch
      %160 = sbr.rel (%p157) target = $region12
    $region11: #{conv2d_groupnorm.1} parent=5 // pred_region
      %s161 = ssub.s32 %s11, 1
      // Predicated region
      $region13: #{conv2d_groupnorm.1} parent=11 // pred_check
        %p162 = pneg %p58
      $region14: #{conv2d_groupnorm.1} parent=11 // pred_check_branch
        %164 = sbr.rel (%p162) target = $region16
      $region15: #{conv2d_groupnorm.1} parent=11 // pred_region
        _
      $region16: #{conv2d_groupnorm.1} parent=11 // pred_fallthru
        _
      // Predicated region
      $region17: #{conv2d_groupnorm.1} parent=11 // pred_check
        %p165 = pneg %p79
      $region18: #{conv2d_groupnorm.1} parent=11 // pred_check_branch
        %167 = sbr.rel (%p165) target = $region20
      $region19: #{conv2d_groupnorm.1} parent=11 // pred_region
        _
      $region20: #{conv2d_groupnorm.1} parent=11 // pred_fallthru
        _
      // Predicated region
      $region21: #{conv2d_groupnorm.1} parent=11 // pred_check
        %p168 = pneg %p100
      $region22: #{conv2d_groupnorm.1} parent=11 // pred_check_branch
        %170 = sbr.rel (%p168) target = $region24
      $region23: #{conv2d_groupnorm.1} parent=11 // pred_region
        _
      $region24: #{conv2d_groupnorm.1} parent=11 // pred_fallthru
        _
      // Predicated region
      $region25: #{conv2d_groupnorm.1} parent=11 // pred_check
        %p171 = pneg %p121
      $region26: #{conv2d_groupnorm.1} parent=11 // pred_check_branch
        %173 = sbr.rel (%p171) target = $region28
      $region27: #{conv2d_groupnorm.1} parent=11 // pred_region
        _
      $region28: #{conv2d_groupnorm.1} parent=11 // pred_fallthru
        _
    $region12: #{conv2d_groupnorm.1} parent=5 // pred_fallthru
      _
    %p174 = scmp.lt.s32.totalorder %s11, 2
    // Predicated region
    $region29: #{conv2d_groupnorm.1} parent=5 // pred_check
      %p175 = pneg %p174
    $region30: #{conv2d_groupnorm.1} parent=5 // pred_check_branch
      %177 = sbr.rel (%p175) target = $region32
    $region31: #{conv2d_groupnorm.1} parent=5 // pred_region
      // Predicated region
      $region33: #{conv2d_groupnorm.1} parent=31 // pred_check
        %p178 = pneg %p31
      $region34: #{conv2d_groupnorm.1} parent=31 // pred_check_branch
        %180 = sbr.rel (%p178) target = $region36
      $region35: #{conv2d_groupnorm.1} parent=31 // pred_region
        %p181 = scmp.lt.s32.totalorder %s11, 1
        %s182 = scalar_select %p181, %s11, 1
        %s183 = smul.addr %s182, 10
        %s184 = smul.addr %s183, 4
        %s185 = scalar_lea.vmem %s0, %s184
      $region36: #{conv2d_groupnorm.1} parent=31 // pred_fallthru
        _
    $region32: #{conv2d_groupnorm.1} parent=5 // pred_fallthru
      _
    %p186 = scmp.le.s32.totalorder 1, %s11
    %p187 = scmp.lt.s32.totalorder %s11, 3
    %p188 = pnand %p186, %p187
    %p189 = pneg %p188
    // Predicated region
    $region37: #{conv2d_groupnorm.1} parent=5 // pred_check
      _
    $region38: #{conv2d_groupnorm.1} parent=5 // pred_check_branch
      %191 = sbr.rel (%p188) target = $region40
    $region39: #{conv2d_groupnorm.1} parent=5 // pred_region
      %s192 = ssub.s32 %s11, 1
      %p193 = scmp.lt.s32.totalorder %s16, 1
      %s194 = scalar_select %p193, %s16, 1
      %s195 = smul.addr %s194, 10
      %s196 = smul.addr %s195, 4
      %s197 = scalar_lea.vmem %s0, %s196
      %p198 = pneg %p37
      %p199 = pneg %p34
      %p200 = pneg %p58
      %p201 = pneg %p55
      %p202 = pneg %p79
      %p203 = pneg %p76
      %p204 = pneg %p100
      %p205 = pneg %p97
      %p206 = pneg %p121
      %p207 = pneg %p118
      %p208 = pneg %p147
      %p209 = pneg %p144
      %p210 = scmp.lt.s32.totalorder %s16, 1
      %s211 = scalar_select %p210, %s16, 1
      %s212 = smul.addr %s211, 4
      %s213 = smul.addr %s212, 8
      %s214 = scalar_lea.vmem %s5, %s213
      %p215 = scmp.lt.s32.totalorder %s16, 1
      %s216 = scalar_select %p215, %s16, 1
      %s217 = smul.addr %s216, 10
      %s218 = smul.addr %s217, 4
      %s219 = scalar_lea.vmem %s0, %s218
      %p220 = scmp.lt.s32.totalorder %s16, 1
      %s221 = scalar_select %p220, %s16, 1
      %s222 = smul.addr %s221, 4
      %s223 = smul.addr %s222, 8
      %s224 = scalar_lea.vmem %s5, %s223
      %v226 = vld [vmem:[%s219] sm:$0xff]
      %v227 = vld [vmem:[%s219 + $0x8] sm:$0xff]
      %v228 = vld [vmem:[%s219 + $0x10] sm:$0xff]
      %v229 = vld [vmem:[%s219 + $0x18] sm:$0xff]
      %v230 = vld [vmem:[%s219 + $0x20] sm:$0x33]
      %v231 = vld [vmem:[%s1] sm:$0xf]
      %v232 = vld [vmem:[%s1 + $0x4] sm:$0xf]
      %v233 = vld [vmem:[%s2] sm:$0xff]
      %v234 = vld [vmem:[%s2 + $0x8] sm:$0xff]
      %236 = vset.pattern.permute.xlu0 0
      %237 = vperm.xlu0 %236, %v233
      %v238 = vpop.permute.xlu0 %237
      %241 = vset.pattern.permute.xlu0 0
      %242 = vperm.xlu0 %241, %v234
      %v243 = vpop.permute.xlu0 %242
      %v247 = vunpack.c.l.b16 %v231
      %v248 = vunpack.c.l.b16 %v232
      %v249 = vpack.c.b16 %v248, %v247
      %v255 = vunpack.c.l.b16 %v226
      %v256 = vunpack.c.h.b16 %v226
      %v257 = vunpack.c.l.b16 %v227
      %v258 = vunpack.c.h.b16 %v227
      %v259 = vunpack.c.l.b16 %v228
      %v260 = vunpack.c.h.b16 %v228
      %v261 = vunpack.c.l.b16 %v229
      %v262 = vunpack.c.h.b16 %v229
      %v263 = vunpack.c.l.b16 %v230
      %v264 = vunpack.c.h.b16 %v230
      %v265 = vpack.c.b16 %v257, %v255
      %v266 = vpack.c.b16 %v258, %v256
      %v267 = vpack.c.b16 %v261, %v259
      %v268 = vpack.c.b16 %v262, %v260
      %v269 = vpack.c.b16 %v263, %v263
      %v270 = vpack.c.b16 %v264, %v264
      %vm275 = vcmask 293888
      %v277 = vsel %vm275, %v249, 0
      %vm279 = vcmask 1041408
      %v281 = vsel %vm279, %v269, 0
      %v284 = vsel %vm279, %v270, 0
      %286 = vmatpush.bf16.msra.mxu0 0
      %287 = vmatpush.bf16.msra.mxu0 0
      %288 = vmatpush.bf16.msra.mxu0 0
      %289 = vmatpush.bf16.msra.mxu0 0
      %290 = vmatpush.bf16.msra.mxu0 0
      %291 = vmatpush.bf16.msra.mxu0 %v281
      %292 = vmatpush.bf16.msra.mxu0 %v267
      %293 = vmatpush.bf16.msra.mxu0 %v265
      %294 = vmatmul.bf16.gmra.mxu0 %v277
      %v295 = vpop.f32.mrf.mxu0
      %v296 = vadd.f32 %v238, %v295
      %v297 = vpop.f32.mrf.mxu0
      %v298 = vadd.f32 %v243, %v297
      %299 = vdwg.mxu0
      %300 = vmatpush.bf16.msra.mxu0 0
      %301 = vmatpush.bf16.msra.mxu0 0
      %302 = vmatpush.bf16.msra.mxu0 0
      %303 = vmatpush.bf16.msra.mxu0 0
      %304 = vmatpush.bf16.msra.mxu0 0
      %305 = vmatpush.bf16.msra.mxu0 %v284
      %306 = vmatpush.bf16.msra.mxu0 %v268
      %307 = vmatpush.bf16.msra.mxu0 %v266
      %308 = vmatmul.bf16.gmra.mxu0 %v277
      %v309 = vpop.f32.mrf.mxu0
      %v310 = vadd.f32 %v238, %v309
      %v311 = vpop.f32.mrf.mxu0
      %v312 = vadd.f32 %v243, %v311
      %313 = vdwg.mxu0
      %v314 = vld [vmem:[%s3] sm:$0xff]
      %v315 = vld [vmem:[%s3 + $0x8] sm:$0xff]
      %v316 = vld [vmem:[%s4] sm:$0xff]
      %v317 = vld [vmem:[%s4 + $0x8] sm:$0xff]
      %vm318 = vcmask 1043456
      %v319 = vsel %vm318, %v296, 0.0
      %v320 = vsel %vm318, %v310, 0.0
      %v321 = vadd.f32 %v319, %v320
      %322 = vadd.xlane.f32.xlu0 %v321
      %v323 = vpop.xlane.xlu0 %322
      %v324 = vsel %vm318, %v323, 0.0
      %v325 = vrot.slane %v324, 4
      %v326 = vadd.f32 %v324, %v325
      %v327 = vrot.slane %v326, 2
      %v328 = vadd.f32 %v326, %v327
      %v329 = vrot.slane %v328, 1
      %v330 = vadd.f32 %v328, %v329
      %v331 = vmul.f32 %v330, 0.0009765625
      %v332 = vsub.f32 %v296, %v331
      %v333 = vsub.f32 %v310, %v331
      %v334 = vmul.f32 %v332, %v332
      %v335 = vmul.f32 %v333, %v333
      %v336 = vsel %vm318, %v334, 0.0
      %v337 = vsel %vm318, %v335, 0.0
      %v338 = vadd.f32 %v336, %v337
      %339 = vadd.xlane.f32.xlu0 %v338
      %v340 = vpop.xlane.xlu0 %339
      %v341 = vsel %vm318, %v340, 0.0
      %v342 = vrot.slane %v341, 4
      %v343 = vadd.f32 %v341, %v342
      %v344 = vrot.slane %v343, 2
      %v345 = vadd.f32 %v343, %v344
      %v346 = vrot.slane %v345, 1
      %v347 = vadd.f32 %v345, %v346
      %v348 = vmul.f32 %v347, 0.0009765625
      %v349 = vadd.f32 %v348, 1e-05
      %v350 = vrsqrt.pop %v349
      %v351 = vmul.f32 %v350, %v349
      %v352 = vmul.f32 %v351, %v350
      %v353 = vmul.f32 0.5, %v352
      %v354 = vsub.f32 1.5, %v353
      %v355 = vmul.f32 %v350, %v354
      %vm356 = vweird.f32 %v349
      %vm357 = vweird.f32 %v350
      %vm358 = vmor %vm356, %vm357
      %v359 = vsel %vm358, %v350, %v355
      %v360 = vmul.f32 %v314, %v359
      %362 = vset.pattern.permute.xlu0 0
      %363 = vperm.xlu0 %362, %v360
      %v364 = vpop.permute.xlu0 %363
      %v366 = vmul.f32 %v332, %v364
      %v367 = vmul.f32 %v333, %v364
      %369 = vset.pattern.permute.xlu0 0
      %370 = vperm.xlu0 %369, %v316
      %v371 = vpop.permute.xlu0 %370
      %v373 = vadd.f32 %v366, %v371
      %v374 = vadd.f32 %v367, %v371
      %vm375 = vcmask 1047556
      %v376 = vsel %vm375, %v296, 0.0
      %v377 = vsel %vm375, %v310, 0.0
      %v378 = vadd.f32 %v376, %v377
      %379 = vadd.xlane.f32.xlu0 %v378
      %v380 = vpop.xlane.xlu0 %379
      %v382 = vrot.slane %v380, 4
      %v384 = vsel %vm318, %v382, 0.0
      %v385 = vrot.slane %v384, 4
      %v386 = vadd.f32 %v384, %v385
      %v387 = vrot.slane %v386, 2
      %v388 = vadd.f32 %v386, %v387
      %v389 = vrot.slane %v388, 1
      %v390 = vadd.f32 %v388, %v389
      %v391 = vmul.f32 %v390, 0.0009765625
      %v392 = vsub.f32 %v296, %v391
      %v393 = vsub.f32 %v310, %v391
      %v394 = vmul.f32 %v392, %v392
      %v395 = vmul.f32 %v393, %v393
      %v396 = vsel %vm375, %v394, 0.0
      %v397 = vsel %vm375, %v395, 0.0
      %v398 = vadd.f32 %v396, %v397
      %399 = vadd.xlane.f32.xlu0 %v398
      %v400 = vpop.xlane.xlu0 %399
      %v402 = vrot.slane %v400, 4
      %v404 = vsel %vm318, %v402, 0.0
      %v405 = vrot.slane %v404, 4
      %v406 = vadd.f32 %v404, %v405
      %v407 = vrot.slane %v406, 2
      %v408 = vadd.f32 %v406, %v407
      %v409 = vrot.slane %v408, 1
      %v410 = vadd.f32 %v408, %v409
      %v411 = vmul.f32 %v410, 0.0009765625
      %v412 = vadd.f32 %v411, 1e-05
      %v413 = vrsqrt.pop %v412
      %v414 = vmul.f32 %v413, %v412
      %v415 = vmul.f32 %v414, %v413
      %v416 = vmul.f32 0.5, %v415
      %v417 = vsub.f32 1.5, %v416
      %v418 = vmul.f32 %v413, %v417
      %vm419 = vweird.f32 %v412
      %vm420 = vweird.f32 %v413
      %vm421 = vmor %vm419, %vm420
      %v422 = vsel %vm421, %v413, %v418
      %v423 = vmul.f32 %v314, %v422
      %425 = vset.pattern.permute.xlu0 0
      %426 = vperm.xlu0 %425, %v423
      %v427 = vpop.permute.xlu0 %426
      %v429 = vmul.f32 %v392, %v427
      %v430 = vmul.f32 %v393, %v427
      %v431 = vadd.f32 %v429, %v371
      %v432 = vadd.f32 %v430, %v371
      %v433 = vsel %vm318, %v298, 0.0
      %v434 = vsel %vm318, %v312, 0.0
      %v435 = vadd.f32 %v433, %v434
      %436 = vadd.xlane.f32.xlu0 %v435
      %v437 = vpop.xlane.xlu0 %436
      %v438 = vsel %vm318, %v437, 0.0
      %v439 = vrot.slane %v438, 4
      %v440 = vadd.f32 %v438, %v439
      %v441 = vrot.slane %v440, 2
      %v442 = vadd.f32 %v440, %v441
      %v443 = vrot.slane %v442, 1
      %v444 = vadd.f32 %v442, %v443
      %v445 = vmul.f32 %v444, 0.0009765625
      %v446 = vsub.f32 %v298, %v445
      %v447 = vsub.f32 %v312, %v445
      %v448 = vmul.f32 %v446, %v446
      %v449 = vmul.f32 %v447, %v447
      %v450 = vsel %vm318, %v448, 0.0
      %v451 = vsel %vm318, %v449, 0.0
      %v452 = vadd.f32 %v450, %v451
      %453 = vadd.xlane.f32.xlu0 %v452
      %v454 = vpop.xlane.xlu0 %453
      %v455 = vsel %vm318, %v454, 0.0
      %v456 = vrot.slane %v455, 4
      %v457 = vadd.f32 %v455, %v456
      %v458 = vrot.slane %v457, 2
      %v459 = vadd.f32 %v457, %v458
      %v460 = vrot.slane %v459, 1
      %v461 = vadd.f32 %v459, %v460
      %v462 = vmul.f32 %v461, 0.0009765625
      %v463 = vadd.f32 %v462, 1e-05
      %v464 = vrsqrt.pop %v463
      %v465 = vmul.f32 %v464, %v463
      %v466 = vmul.f32 %v465, %v464
      %v467 = vmul.f32 0.5, %v466
      %v468 = vsub.f32 1.5, %v467
      %v469 = vmul.f32 %v464, %v468
      %vm470 = vweird.f32 %v463
      %vm471 = vweird.f32 %v464
      %vm472 = vmor %vm470, %vm471
      %v473 = vsel %vm472, %v464, %v469
      %v474 = vmul.f32 %v315, %v473
      %476 = vset.pattern.permute.xlu0 0
      %477 = vperm.xlu0 %476, %v474
      %v478 = vpop.permute.xlu0 %477
      %v480 = vmul.f32 %v446, %v478
      %v481 = vmul.f32 %v447, %v478
      %483 = vset.pattern.permute.xlu0 0
      %484 = vperm.xlu0 %483, %v317
      %v485 = vpop.permute.xlu0 %484
      %v487 = vadd.f32 %v480, %v485
      %v488 = vadd.f32 %v481, %v485
      %v489 = vsel %vm375, %v298, 0.0
      %v490 = vsel %vm375, %v312, 0.0
      %v491 = vadd.f32 %v489, %v490
      %492 = vadd.xlane.f32.xlu0 %v491
      %v493 = vpop.xlane.xlu0 %492
      %v495 = vrot.slane %v493, 4
      %v497 = vsel %vm318, %v495, 0.0
      %v498 = vrot.slane %v497, 4
      %v499 = vadd.f32 %v497, %v498
      %v500 = vrot.slane %v499, 2
      %v501 = vadd.f32 %v499, %v500
      %v502 = vrot.slane %v501, 1
      %v503 = vadd.f32 %v501, %v502
      %v504 = vmul.f32 %v503, 0.0009765625
      %v505 = vsub.f32 %v298, %v504
      %v506 = vsub.f32 %v312, %v504
      %v507 = vmul.f32 %v505, %v505
      %v508 = vmul.f32 %v506, %v506
      %v509 = vsel %vm375, %v507, 0.0
      %v510 = vsel %vm375, %v508, 0.0
      %v511 = vadd.f32 %v509, %v510
      %512 = vadd.xlane.f32.xlu0 %v511
      %v513 = vpop.xlane.xlu0 %512
      %v515 = vrot.slane %v513, 4
      %v517 = vsel %vm318, %v515, 0.0
      %v518 = vrot.slane %v517, 4
      %v519 = vadd.f32 %v517, %v518
      %v520 = vrot.slane %v519, 2
      %v521 = vadd.f32 %v519, %v520
      %v522 = vrot.slane %v521, 1
      %v523 = vadd.f32 %v521, %v522
      %v524 = vmul.f32 %v523, 0.0009765625
      %v525 = vadd.f32 %v524, 1e-05
      %v526 = vrsqrt.pop %v525
      %v527 = vmul.f32 %v526, %v525
      %v528 = vmul.f32 %v527, %v526
      %v529 = vmul.f32 0.5, %v528
      %v530 = vsub.f32 1.5, %v529
      %v531 = vmul.f32 %v526, %v530
      %vm532 = vweird.f32 %v525
      %vm533 = vweird.f32 %v526
      %vm534 = vmor %vm532, %vm533
      %v535 = vsel %vm534, %v526, %v531
      %v536 = vmul.f32 %v315, %v535
      %538 = vset.pattern.permute.xlu0 0
      %539 = vperm.xlu0 %538, %v536
      %v540 = vpop.permute.xlu0 %539
      %v542 = vmul.f32 %v505, %v540
      %v543 = vmul.f32 %v506, %v540
      %v544 = vadd.f32 %v542, %v485
      %v545 = vadd.f32 %v543, %v485
      %v546 = vsel %vm318, %v373, %v431
      %v547 = vsel %vm318, %v374, %v432
      %v548 = vsel %vm318, %v487, %v544
      %v549 = vsel %vm318, %v488, %v545
      %550 = vst [vmem:[%s224] sm:$0xff] %v546
      %551 = vst [vmem:[%s224 + $0x8] sm:$0xff] %v547
      %552 = vst [vmem:[%s224 + $0x10] sm:$0xff] %v548
      %553 = vst [vmem:[%s224 + $0x18] sm:$0xff] %v549
      %p554 = scmp.lt.s32.totalorder %s16, 1
      %s555 = scalar_select %p554, %s16, 1
      %s556 = smul.addr %s555, 4
      %s557 = smul.addr %s556, 8
      %s558 = scalar_lea.vmem %s5, %s557
      // Predicated region
      $region41: #{conv2d_groupnorm.1} parent=39 // pred_check
        %p559 = pneg %p144
      $region42: #{conv2d_groupnorm.1} parent=39 // pred_check_branch
        %561 = sbr.rel (%p559) target = $region44
      $region43: #{conv2d_groupnorm.1} parent=39 // pred_region
        _
      $region44: #{conv2d_groupnorm.1} parent=39 // pred_fallthru
        _
    $region40: #{conv2d_groupnorm.1} parent=5 // pred_fallthru
      _
    %p562 = scmp.le.s32.totalorder 2, %s11
    // Predicated region
    $region45: #{conv2d_groupnorm.1} parent=5 // pred_check
      %p563 = pneg %p562
    $region46: #{conv2d_groupnorm.1} parent=5 // pred_check_branch
      %565 = sbr.rel (%p563) target = $region48
    $region47: #{conv2d_groupnorm.1} parent=5 // pred_region
      %s566 = ssub.s32 %s11, 2
      // Predicated region
      $region49: #{conv2d_groupnorm.1} parent=47 // pred_check
        %p567 = pneg %p150
      $region50: #{conv2d_groupnorm.1} parent=47 // pred_check_branch
        %569 = sbr.rel (%p567) target = $region52
      $region51: #{conv2d_groupnorm.1} parent=47 // pred_region
        %p570 = scmp.lt.s32.totalorder %s17, 1
        %s571 = scalar_select %p570, %s17, 1
        %s572 = smul.addr %s571, 4
        %s573 = smul.addr %s572, 8
        %s574 = scalar_lea.vmem %s5, %s573
      $region52: #{conv2d_groupnorm.1} parent=47 // pred_fallthru
        _
    $region48: #{conv2d_groupnorm.1} parent=5 // pred_fallthru
      _
  $region6: #{conv2d_groupnorm.1} parent=0 // loop_footer
    %s15 = sadd.s32 1, %s11
  $region7: #{conv2d_groupnorm.1} parent=0 // loop_footer_branch
    %10 = sbr.rel target = $region3
  $region8: #{conv2d_groupnorm.1} parent=0 // loop_exit
    _

</llo_original>
